<compile_context>
chip_gen: v5e
topology: v5e:2x2
jax: 0.10.0
libtpu: 0.0.40
codegen_flags: <defaults>
</compile_context>

<pallas_src>
import jax
import jax.numpy as jnp
from jax.experimental import pallas as pl
from jax.experimental.pallas import tpu as pltpu

_MIB = 1024 * 1024
# A (block_b, 1) f32 output block pads its lane dim to 128 in VMEM.
_COL_ROW_BYTES = 128 * 4


def _cosine_kernel(a_ref, b_ref, cos_ref):
    """Fused F.normalize(p=2, dim=1, eps=1e-12) + F.cosine_similarity.

    a_ref, b_ref: (block_b, D) tiles in native dtype (bf16/f32), cast on load.
    cos_ref:      (block_b, 1) f32 cosine similarities.
    """
    a = a_ref[...].astype(jnp.float32)                 # cast-on-load
    b = b_ref[...].astype(jnp.float32)

    dot = jnp.sum(a * b, axis=1, keepdims=True)        # (block_b, 1)
    na2 = jnp.sum(a * a, axis=1, keepdims=True)
    nb2 = jnp.sum(b * b, axis=1, keepdims=True)

    na = jnp.maximum(jnp.sqrt(na2), 1e-12)             # F.normalize eps
    nb = jnp.maximum(jnp.sqrt(nb2), 1e-12)
    # Exact divide (review: approx reciprocal error is amplified by scale=64).
    # Minor semantic note: F.cosine_similarity additionally clamps the product
    # of the *unit* norms at 1e-8 — only differs for exactly-zero rows.
    cos_ref[...] = dot / (na * nb)


def _vmem_capacity_bytes(default=64 * _MIB):
    """Best-effort physical VMEM query; falls back to the v7x (smallest) size."""
    try:
        cap = getattr(pltpu.get_tpu_info(), "vmem_capacity_bytes", None)
        if cap:
            return int(cap)
    except Exception:
        pass
    return default


def pairwise_cosine(emb_a, emb_b, *, block_b=None):
    """Row-wise cosine similarity of two (B, D) embedding batches -> (B,) f32."""
    B, D = emb_a.shape
    assert emb_b.shape == (B, D), (emb_a.shape, emb_b.shape)
    isa = jnp.dtype(emb_a.dtype).itemsize
    isb = jnp.dtype(emb_b.dtype).itemsize

    cap = _vmem_capacity_bytes()
    # VMEM cost per batch row across all double-buffered blocks:
    #   2 buffers x (a + b) input rows  +  2 buffers x 128-lane-padded cos row.
    row_bytes = 2 * D * (isa + isb) + 2 * _COL_ROW_BYTES

    if block_b is None:
        # ~40 MiB of buffers on v7x (64 MiB VMEM), ~72 MiB on v5e/v6e (128 MiB).
        budget = max(8 * _MIB, min(3 * cap // 4 - 8 * _MIB, 72 * _MIB))
        block_b = budget // row_bytes
    block_b = int(block_b)

    if block_b >= B:
        block_b = B                      # single full-batch tile (full-dim block)
    else:
        g = 64 if block_b >= 64 else 8   # keep the (8,128)/packing constraints happy
        block_b = max(8, (block_b // g) * g)

    n_tiles = (B + block_b - 1) // block_b
    b_pad = n_tiles * block_b            # only the output is padded (we allocate it)

    need = block_b * row_bytes
    vmem_limit = int(min(max(32 * _MIB, need + 8 * _MIB), 3 * cap // 4, 96 * _MIB))

    grid_spec = pltpu.PrefetchScalarGridSpec(
        num_scalar_prefetch=0,
        grid=(n_tiles,),
        in_specs=[
            pl.BlockSpec((block_b, D), lambda i: (i, 0)),
            pl.BlockSpec((block_b, D), lambda i: (i, 0)),
        ],
        out_specs=pl.BlockSpec((block_b, 1), lambda i: (i, 0)),
    )

    cost = pl.CostEstimate(
        flops=6 * B * D + 8 * B,
        transcendentals=2 * B,
        bytes_accessed=B * D * (isa + isb) + 4 * b_pad,
    )

    cos = pl.pallas_call(
        _cosine_kernel,
        out_shape=jax.ShapeDtypeStruct((b_pad, 1), jnp.float32),
        grid_spec=grid_spec,
        compiler_params=pltpu.CompilerParams(
            # Carry-free grid -> safe to shard across v7x's two TensorCores.
            dimension_semantics=("parallel",),
            vmem_limit_bytes=vmem_limit,
        ),
        cost_estimate=cost,
    )(emb_a, emb_b)

    # Drop the ragged-tail garbage rows (no host-side input padding was done).
    return cos[:B, 0]


def lmcl_loss(emb_a, emb_b, labels, margin=0.35, scale=64.0, block_b=None):
    """LMCLLoss.forward given the two embedding batches and integer labels."""
    cos = pairwise_cosine(emb_a, emb_b, block_b=block_b)          # (B,) f32

    labels = jnp.asarray(labels)
    # (labels == 1).float() * margin, folded arithmetically (labels are 0/1).
    pos_margin = (labels == 1).astype(jnp.float32) * jnp.float32(margin)
    scores = jnp.float32(scale) * (cos - pos_margin)              # (B,)

    # log_softmax over the batch axis + MSE against labels.float():
    # O(B) tail, done in plain JAX for exact / cancellation-free numerics.
    log_probs = jax.nn.log_softmax(scores, axis=0)
    target = labels.astype(jnp.int32).astype(jnp.float32)
    return jnp.mean(jnp.square(log_probs - target))


def _lmcl_loss_reference(emb_a, emb_b, labels, margin=0.35, scale=64.0):
    """Pure-jnp reference mirroring the PyTorch module (for verification)."""
    a = emb_a.astype(jnp.float32)
    b = emb_b.astype(jnp.float32)
    a_n = a / jnp.maximum(jnp.linalg.norm(a, axis=1, keepdims=True), 1e-12)
    b_n = b / jnp.maximum(jnp.linalg.norm(b, axis=1, keepdims=True), 1e-12)
    denom = jnp.maximum(
        jnp.linalg.norm(a_n, axis=1) * jnp.linalg.norm(b_n, axis=1), 1e-8)
    cos = jnp.sum(a_n * b_n, axis=1) / denom
    pos_margin = (labels == 1).astype(jnp.float32) * margin
    scores = scale * (cos - pos_margin)
    log_probs = jax.nn.log_softmax(scores, axis=0)
    return jnp.mean(jnp.square(log_probs - labels.astype(jnp.float32)))


if __name__ == "__main__":
    key = jax.random.PRNGKey(0)
    ka, kb, kl, kc, kd, ke = jax.random.split(key, 6)

    # Case 1: small single-tile batch, f32 (the reference module's dtype).
    B, D = 8, 32
    emb_a = jax.random.normal(ka, (B, D), dtype=jnp.float32)
    emb_b = jax.random.normal(kb, (B, D), dtype=jnp.float32)
    labels = jax.random.bernoulli(kl, 0.5, (B,)).astype(jnp.int32)

    loss = lmcl_loss(emb_a, emb_b, labels, margin=0.35, scale=64.0)
    ref = _lmcl_loss_reference(emb_a, emb_b, labels, margin=0.35, scale=64.0)
    jax.block_until_ready((loss, ref))
    assert jnp.allclose(loss, ref, rtol=5e-3, atol=5e-3), (loss, ref)

    # Case 2: multi-tile grid with a ragged last block (no host-side padding).
    B2, D2 = 300, 64
    a2 = jax.random.normal(kc, (B2, D2), dtype=jnp.float32)
    b2 = jax.random.normal(kd, (B2, D2), dtype=jnp.float32)
    l2 = jax.random.bernoulli(ke, 0.5, (B2,)).astype(jnp.int32)
    loss2 = lmcl_loss(a2, b2, l2, block_b=128)
    ref2 = _lmcl_loss_reference(a2, b2, l2)
    jax.block_until_ready((loss2, ref2))
    assert jnp.allclose(loss2, ref2, rtol=5e-3, atol=5e-3), (loss2, ref2)

    # Case 3: bf16 embeddings stay bf16 on HBM (cast-on-load in the kernel).
    loss_bf16 = lmcl_loss(emb_a.astype(jnp.bfloat16),
                          emb_b.astype(jnp.bfloat16), labels)
    jax.block_until_ready(loss_bf16)

    print("KERNEL_OK")
</pallas_src>

<mosaic_0001>
module attributes {stable_mosaic.version = 11 : i64} {
  func.func @_cosine_kernel(%arg0: i32, %arg1: memref<8x32xf32, #tpu.memory_space<vmem>>, %arg2: memref<8x32xf32, #tpu.memory_space<vmem>>, %arg3: memref<8x1xf32, #tpu.memory_space<vmem>>) attributes {dimension_semantics = [#tpu.dimension_semantics<parallel>], iteration_bounds = array<i64: 1>, scalar_prefetch = 0 : i64, scratch_operands = 0 : i64, tpu.core_type = #tpu.core_type<tc>, window_params = [{transform_indices = @transform_0, window_bounds = array<i64: 8, 32>}, {transform_indices = @transform_1, window_bounds = array<i64: 8, 32>}, {transform_indices = @transform_2, window_bounds = array<i64: 8, 1>}]} {
    %c0 = arith.constant 0 : index
    %c0_0 = arith.constant 0 : index
    %0 = vector.load %arg1[%c0, %c0_0] : memref<8x32xf32, #tpu.memory_space<vmem>>, vector<8x32xf32>
    %c0_1 = arith.constant 0 : index
    %c0_2 = arith.constant 0 : index
    %1 = vector.load %arg2[%c0_1, %c0_2] : memref<8x32xf32, #tpu.memory_space<vmem>>, vector<8x32xf32>
    %2 = arith.mulf %0, %1 : vector<8x32xf32>
    %cst = arith.constant dense<0.000000e+00> : vector<8xf32>
    %3 = vector.multi_reduction <add>, %2, %cst [1] : vector<8x32xf32> to vector<8xf32>
    %4 = vector.shape_cast %3 : vector<8xf32> to vector<8x1xf32>
    %5 = arith.mulf %0, %0 : vector<8x32xf32>
    %cst_3 = arith.constant dense<0.000000e+00> : vector<8xf32>
    %6 = vector.multi_reduction <add>, %5, %cst_3 [1] : vector<8x32xf32> to vector<8xf32>
    %7 = vector.shape_cast %6 : vector<8xf32> to vector<8x1xf32>
    %8 = arith.mulf %1, %1 : vector<8x32xf32>
    %cst_4 = arith.constant dense<0.000000e+00> : vector<8xf32>
    %9 = vector.multi_reduction <add>, %8, %cst_4 [1] : vector<8x32xf32> to vector<8xf32>
    %10 = vector.shape_cast %9 : vector<8xf32> to vector<8x1xf32>
    %11 = math.sqrt %7 : vector<8x1xf32>
    %cst_5 = arith.constant 9.99999996E-13 : f32
    %12 = vector.broadcast %cst_5 : f32 to vector<8x1xf32>
    %13 = arith.maximumf %11, %12 : vector<8x1xf32>
    %14 = math.sqrt %10 : vector<8x1xf32>
    %cst_6 = arith.constant 9.99999996E-13 : f32
    %15 = vector.broadcast %cst_6 : f32 to vector<8x1xf32>
    %16 = arith.maximumf %14, %15 : vector<8x1xf32>
    %17 = arith.mulf %13, %16 : vector<8x1xf32>
    %18 = arith.divf %4, %17 : vector<8x1xf32>
    %c0_7 = arith.constant 0 : index
    %c0_8 = arith.constant 0 : index
    %19 = vector.load %arg3[%c0_7, %c0_8] : memref<8x1xf32, #tpu.memory_space<vmem>>, vector<8x1xf32>
    tpu.vector_store %arg3[%c0_7, %c0_8], %18 {strides = array<i32>} : memref<8x1xf32, #tpu.memory_space<vmem>>, vector<8x1xf32>,
    return
  }
  func.func @transform_0(%arg0: i32) -> (i32, i32) {
    %c0_i32 = arith.constant 0 : i32
    %c0_i32_0 = arith.constant 0 : i32
    return %arg0, %c0_i32 : i32, i32
  }
  func.func @transform_1(%arg0: i32) -> (i32, i32) {
    %c0_i32 = arith.constant 0 : i32
    %c0_i32_0 = arith.constant 0 : i32
    return %arg0, %c0_i32 : i32, i32
  }
  func.func @transform_2(%arg0: i32) -> (i32, i32) {
    %c0_i32 = arith.constant 0 : i32
    %c0_i32_0 = arith.constant 0 : i32
    return %arg0, %c0_i32 : i32, i32
  }
}

</mosaic_0001>

<llo_original>
// kernel: tpu_custom_call.1
$region0: #{tpu_custom_call.1}
  #allocation0 [shape = 'u32[]', space=smem, size = 0x4, offset = 0x4, fixed_abs, tag = 'smem constant byte address 0x4 - core index']
  #allocation1 [shape = 'u32[72,128]{1,0:T(1,128)}', space=vmem, size = 0x9000, scoped, tag = 'internal scratch']
  %s0 = inlined_call_operand.hbm [shape: f32[8,32], index: 0, kind: input, shape index: {}]
  %s1 = inlined_call_operand.hbm [shape: f32[8,32], index: 1, kind: input, shape index: {}]
  %s2 = inlined_call_operand.vmem [shape: f32[8,1], index: 2, kind: output, shape index: {}]
  %s3 = sld [smem:[#allocation0]]
  $region26: #{tpu_custom_call.1} parent=0
    _
  %s5 = ssub.s32 1, %s3
  %s6 = scalar_select 0, %s5, %s3
  $region1: #{tpu_custom_call.1} parent=0
    #allocation2 [shape = 'u8[4096]{0}', space=vmem, size = 0x1000, scoped, tag = 'input window, operand 0, single buffered']
    #allocation3 [shape = 's32[1]{0}', space=sflag, size = 0x4, scoped, tag = 'scoped memory for tpu_custom_call.1']
    #allocation4 [shape = 'u8[4096]{0}', space=vmem, size = 0x1000, scoped, tag = 'input window, operand 1, single buffered']
    #allocation5 [shape = 's32[1]{0}', space=sflag, size = 0x4, scoped, tag = 'scoped memory for tpu_custom_call.1']
    %7 = vsyncpa [#allocation3], 0
    %8 = vsyncpa [#allocation5], 0
    // Predicated region
    $region2: #{tpu_custom_call.1} parent=1 // pred_check
      _
    $region3: #{tpu_custom_call.1} parent=1 // pred_check_branch
      %10 = sbr.rel (0) target = $region5
    $region4: #{tpu_custom_call.1} parent=1 // pred_region
      %12 = vsyncadd [#allocation3], 0
      %s14 = sshll.u32 %s0, 4
      %s15 = int_to_ptr.hbm [resolvable:$true] %s14
      %s16 = sshll.u32 [#allocation2], 4
      %s17 = int_to_ptr.vmem [resolvable:$true] %s16
      %19 = dma.hbm_to_vmem [thread:$0]  %s15, 128, %s17, [#allocation3]
    $region5: #{tpu_custom_call.1} parent=1 // pred_fallthru
      _
    // Predicated region
    $region6: #{tpu_custom_call.1} parent=1 // pred_check
      _
    $region7: #{tpu_custom_call.1} parent=1 // pred_check_branch
      %21 = sbr.rel (0) target = $region9
    $region8: #{tpu_custom_call.1} parent=1 // pred_region
      %23 = vsyncadd [#allocation5], 0
      %s25 = sshll.u32 %s1, 4
      %s26 = int_to_ptr.hbm [resolvable:$true] %s25
      %s27 = sshll.u32 [#allocation4], 4
      %s28 = int_to_ptr.vmem [resolvable:$true] %s27
      %30 = dma.hbm_to_vmem [thread:$0]  %s26, 128, %s28, [#allocation5]
    $region9: #{tpu_custom_call.1} parent=1 // pred_fallthru
      _
    // Predicated region
    $region10: #{tpu_custom_call.1} parent=1 // pred_check
      _
    $region11: #{tpu_custom_call.1} parent=1 // pred_check_branch
      %32 = sbr.rel (0) target = $region13
    $region12: #{tpu_custom_call.1} parent=1 // pred_region
      %34 = dma.done [#allocation3], 128
    $region13: #{tpu_custom_call.1} parent=1 // pred_fallthru
      _
    // Predicated region
    $region14: #{tpu_custom_call.1} parent=1 // pred_check
      _
    $region15: #{tpu_custom_call.1} parent=1 // pred_check_branch
      %36 = sbr.rel (0) target = $region17
    $region16: #{tpu_custom_call.1} parent=1 // pred_region
      %38 = dma.done [#allocation5], 128
    $region17: #{tpu_custom_call.1} parent=1 // pred_fallthru
      _
    %v39 = vld [vmem:[#allocation2] sm:$0xff]
    %v40 = vld [vmem:[#allocation4] sm:$0xff]
    %v41 = vmul.f32 %v39, %v40
    %vm42 = vcmask 261120
    %v43 = vsel %vm42, %v41, 0.0
    %44 = vadd.xlane.f32.xlu0 %v43
    %v45 = vpop.xlane.xlu0 %44
    %v46 = vmul.f32 %v39, %v39
    %v47 = vsel %vm42, %v46, 0.0
    %48 = vadd.xlane.f32.xlu0 %v47
    %v49 = vpop.xlane.xlu0 %48
    %v50 = vmul.f32 %v40, %v40
    %v51 = vsel %vm42, %v50, 0.0
    %52 = vadd.xlane.f32.xlu0 %v51
    %v53 = vpop.xlane.xlu0 %52
    %v54 = vrsqrt.pop %v49
    %v55 = vmul.f32 %v54, %v49
    %v56 = vmul.f32 %v55, %v54
    %v57 = vmul.f32 0.5, %v56
    %v58 = vsub.f32 1.5, %v57
    %v59 = vmul.f32 %v54, %v58
    %v60 = vmul.f32 %v49, %v59
    %vm61 = vcmp.eq.f32.partialorder %v49, inf
    %v62 = vsel %vm61, %v49, %v60
    %vm63 = vcmp.eq.f32.partialorder %v49, 0.0
    %v64 = vand.u32 %v49, 2147483648
    %v65 = vsel %vm63, %v64, %v62
    %v66 = vmax.f32 %v65, 1e-12
    %v67 = vrsqrt.pop %v53
    %v68 = vmul.f32 %v67, %v53
    %v69 = vmul.f32 %v68, %v67
    %v70 = vmul.f32 0.5, %v69
    %v71 = vsub.f32 1.5, %v70
    %v72 = vmul.f32 %v67, %v71
    %v73 = vmul.f32 %v53, %v72
    %vm74 = vcmp.eq.f32.partialorder %v53, inf
    %v75 = vsel %vm74, %v53, %v73
    %vm76 = vcmp.eq.f32.partialorder %v53, 0.0
    %v77 = vand.u32 %v53, 2147483648
    %v78 = vsel %vm76, %v77, %v75
    %v79 = vmax.f32 %v78, 1e-12
    %v80 = vmul.f32 %v66, %v79
    %v81 = vrcp.pop %v80
    %v82 = vmul.f32 %v80, %v81
    %v83 = vsub.f32 1.0, %v82
    %v84 = vmul.f32 %v81, %v83
    %v85 = vadd.f32 %v81, %v84
    %vm86 = vweird.f32 %v80
    %vm87 = vweird.f32 %v81
    %vm88 = vmor %vm86, %vm87
    %v89 = vsel %vm88, %v81, %v85
    %v90 = vand.u32 2147483647, %v80
    %vm91 = vcmp.eq.f32.partialorder %v90, 8.507059e+37
    %v92 = vand.u32 %v80, 2147483648
    %v93 = vor.u32 1.1754944e-38, %v92
    %v94 = vsel %vm91, %v93, %v89
    %v95 = vmul.f32 %v45, %v94
    %vm96 = vcmask 7168
    %97 = vst.msk [vmem:[%s2] sm:$0xff] %vm96, %v95
    // Predicated region
    $region18: #{tpu_custom_call.1} parent=1 // pred_check
      _
    $region19: #{tpu_custom_call.1} parent=1 // pred_check_branch
      %99 = sbr.rel (0) target = $region21
    $region20: #{tpu_custom_call.1} parent=1 // pred_region
      _
    $region21: #{tpu_custom_call.1} parent=1 // pred_fallthru
      _
    // Predicated region
    $region22: #{tpu_custom_call.1} parent=1 // pred_check
      _
    $region23: #{tpu_custom_call.1} parent=1 // pred_check_branch
      %101 = sbr.rel (0) target = $region25
    $region24: #{tpu_custom_call.1} parent=1 // pred_region
      _
    $region25: #{tpu_custom_call.1} parent=1 // pred_fallthru
      _
    %102 = vsyncpa [#allocation3], 1
    %103 = vsyncpa [#allocation5], 1

</llo_original>
